<compile_context>
chip_gen: v7x
topology: tpu7x:2x2x1
jax: 0.10.0
libtpu: 0.0.40
codegen_flags: <defaults>
</compile_context>

<pallas_src>
import functools

import jax
import jax.numpy as jnp
from jax.experimental import pallas as pl
from jax.experimental.pallas import tpu as pltpu

LANES = 128      # TPU lane width -> lane-dense compute slabs.
SUBLANES = 8     # f32 sublane granularity -> batch-tile multiple.
MAX_TB = 512     # ~85% of HBM roofline per measurements; VMEM is a non-issue.


def _round_up(x, m):
    return (x + m - 1) // m * m


def _cdiv(a, b):
    return (a + b - 1) // b


def _policy_kernel(x_ref, w1_ref, b1_ref, w2_ref, b2_ref, o_ref, *, num_actions):
    # One batch tile per grid step; two MXU matmuls + VPU bias/relu, fused in VMEM.
    x = x_ref[...]
    h = jnp.dot(x, w1_ref[...], preferred_element_type=jnp.float32) + b1_ref[...]
    h = jnp.maximum(h, 0.0)                                    # F.relu(linear1(x))
    y = jnp.dot(h, w2_ref[...], preferred_element_type=jnp.float32) + b2_ref[...]
    y = jnp.maximum(y, 0.0) + 1e-07                            # F.relu(linear2(x)) + 1e-7
    # Lane-dense compute slab, but only the real action columns hit HBM
    # (masked 2-lane vst is trivial vs. the DMA bytes saved).
    o_ref[...] = y[:, :num_actions]


def _choose_batch_tile(batch):
    """Batch tile >= 8 sublanes, capped at 512, >= 2 grid steps when possible."""
    b_min = _round_up(max(batch, SUBLANES), SUBLANES)
    if batch <= SUBLANES:
        return b_min, b_min                         # tiny / dispatch-bound case
    tb = min(MAX_TB, _round_up(_cdiv(b_min, 2), SUBLANES))   # >= 2 steps -> both v7x TCs
    return tb, _round_up(batch, tb)


@functools.partial(jax.jit, static_argnames=("num_actions",))
def policy_forward(state, w1_p, b1_p, w2_p, b2_p, *, num_actions):
    """state: [B, num_inputs] f32.  Params are the *prepared* (padded) ones:
    w1_p: [num_inputs, H_pad]; b1_p: [1, H_pad]; w2_p: [H_pad, N_pad];
    b2_p: [1, N_pad].  Returns [B, num_actions] f32."""
    batch, num_inputs = state.shape
    h_pad = w1_p.shape[1]
    n_pad = w2_p.shape[1]

    tb, b_pad = _choose_batch_tile(batch)

    # Match the prepared W1 dtype (bf16 on v6e/v7x halves the state read DMA;
    # dots keep preferred_element_type=f32 so accuracy is preserved).
    x = state.astype(w1_p.dtype)
    if b_pad != batch:
        x = jnp.pad(x, ((0, b_pad - batch), (0, 0)))

    # Honest scheduler hint: per-step state DMA + resident weights + unpadded output.
    flops = 2 * b_pad * (num_inputs * h_pad + h_pad * n_pad)
    bytes_accessed = (
        jnp.dtype(x.dtype).itemsize * b_pad * num_inputs
        + jnp.dtype(w1_p.dtype).itemsize * w1_p.size
        + 4 * (b1_p.size + w2_p.size + b2_p.size)
        + 4 * b_pad * num_actions
    )

    kernel = functools.partial(_policy_kernel, num_actions=num_actions)

    out = pl.pallas_call(
        kernel,
        out_shape=jax.ShapeDtypeStruct((b_pad, num_actions), jnp.float32),
        grid=(b_pad // tb,),
        in_specs=[
            pl.BlockSpec((tb, num_inputs), lambda i: (i, 0)),      # batch-tiled state
            pl.BlockSpec((num_inputs, h_pad), lambda i: (0, 0)),   # VMEM-resident W1
            pl.BlockSpec((1, h_pad), lambda i: (0, 0)),            # VMEM-resident b1
            pl.BlockSpec((h_pad, n_pad), lambda i: (0, 0)),        # VMEM-resident W2
            pl.BlockSpec((1, n_pad), lambda i: (0, 0)),            # VMEM-resident b2
        ],
        # Unpadded output: last dim equals the full array dim -> legal block.
        out_specs=pl.BlockSpec((tb, num_actions), lambda i: (i, 0)),
        compiler_params=pltpu.CompilerParams(
            dimension_semantics=("parallel",),   # shard batch tiles across v7x TCs
        ),
        cost_estimate=pl.CostEstimate(
            flops=flops, transcendentals=0, bytes_accessed=int(bytes_accessed)),
    )(x, w1_p, b1_p, w2_p, b2_p)

    return out[:batch]


def init_params(key, num_inputs, num_actions, hidden_size):
    """Deterministic init mimicking nn.Linear's default U(-1/sqrt(fan_in), ...)."""
    k1, k2, k3, k4 = jax.random.split(key, 4)
    bound1 = 1.0 / jnp.sqrt(num_inputs)
    bound2 = 1.0 / jnp.sqrt(hidden_size)
    # Stored already transposed to [in, out]; biases kept 2-D for TPU broadcast.
    w1 = jax.random.uniform(k1, (num_inputs, hidden_size), jnp.float32, -bound1, bound1)
    b1 = jax.random.uniform(k2, (1, hidden_size), jnp.float32, -bound1, bound1)
    w2 = jax.random.uniform(k3, (hidden_size, num_actions), jnp.float32, -bound2, bound2)
    b2 = jax.random.uniform(k4, (1, num_actions), jnp.float32, -bound2, bound2)
    return w1, b1, w2, b2


def prepare_params(w1, b1, w2, b2, *, use_bf16_inputs=False):
    """One-time (out of the forward hot path) lane-dense padding of the weights.

    hidden -> multiple of 128 (lane-dense intermediate h), num_actions -> 128
    (lane-dense second matmul; the kernel slices back on store). Zero padding is
    exact: padded hidden columns give relu(0)=0 and contribute nothing to y.
    """
    num_inputs, hidden = w1.shape
    num_actions = w2.shape[1]
    h_pad = _round_up(hidden, LANES)
    n_pad = _round_up(num_actions, LANES)
    w1_p = jnp.pad(w1, ((0, 0), (0, h_pad - hidden)))
    b1_p = jnp.pad(b1, ((0, 0), (0, h_pad - hidden)))
    w2_p = jnp.pad(w2, ((0, h_pad - hidden), (0, n_pad - num_actions)))
    b2_p = jnp.pad(b2, ((0, 0), (0, n_pad - num_actions)))
    if use_bf16_inputs:
        # v6e/v7x: bf16 MXU inputs for the first matmul; f32 accumulation and
        # f32 VPU math are kept in the kernel (also keeps v5e on safe paths).
        w1_p = w1_p.astype(jnp.bfloat16)
    return w1_p, b1_p, w2_p, b2_p


if __name__ == "__main__":
    # Shapes consistent with the module: PolicyNetwork(num_inputs=8,
    # num_actions=2, hidden_size=32), batch of 2 env states.
    batch, num_inputs, num_actions, hidden_size = 2, 8, 2, 32

    key = jax.random.PRNGKey(0)
    k_state, k_params = jax.random.split(key)
    state = jax.random.normal(k_state, (batch, num_inputs), jnp.float32)
    w1, b1, w2, b2 = init_params(k_params, num_inputs, num_actions, hidden_size)

    # --- f32 path (exact; v5e/v6e/v7x) ---
    params_f32 = prepare_params(w1, b1, w2, b2)
    out = policy_forward(state, *params_f32, num_actions=num_actions)
    jax.block_until_ready(out)

    ref = jnp.maximum(state @ w1 + b1, 0.0)
    ref = jnp.maximum(ref @ w2 + b2, 0.0) + 1e-07
    assert out.shape == (batch, num_actions)
    assert jnp.allclose(out, ref, atol=1e-5, rtol=1e-5)

    # Second call hits the jit cache (no re-trace/re-compile).
    out2 = policy_forward(state, *params_f32, num_actions=num_actions)
    jax.block_until_ready(out2)
    assert jnp.allclose(out2, ref, atol=1e-5, rtol=1e-5)

    # --- larger batch exercises a multi-step grid (>= 2 tiles -> both v7x TCs) ---
    big_batch = 64
    state_big = jax.random.normal(jax.random.PRNGKey(1), (big_batch, num_inputs),
                                  jnp.float32)
    out_big = policy_forward(state_big, *params_f32, num_actions=num_actions)
    jax.block_until_ready(out_big)
    ref_big = jnp.maximum(state_big @ w1 + b1, 0.0)
    ref_big = jnp.maximum(ref_big @ w2 + b2, 0.0) + 1e-07
    assert out_big.shape == (big_batch, num_actions)
    assert jnp.allclose(out_big, ref_big, atol=1e-5, rtol=1e-5)

    # --- optional bf16 input path (v6e/v7x MXU dtype; f32 accumulate) ---
    params_bf16 = prepare_params(w1, b1, w2, b2, use_bf16_inputs=True)
    state_bf = jax.random.normal(jax.random.PRNGKey(2), (32, num_inputs), jnp.float32)
    out_bf = policy_forward(state_bf, *params_bf16, num_actions=num_actions)
    jax.block_until_ready(out_bf)
    ref_bf = jnp.maximum(state_bf @ w1 + b1, 0.0)
    ref_bf = jnp.maximum(ref_bf @ w2 + b2, 0.0) + 1e-07
    assert out_bf.shape == (32, num_actions)
    assert jnp.allclose(out_bf, ref_bf, atol=1e-1, rtol=1e-1)   # bf16 input rounding

    # TODO(synk): get_action's Kumaraswamy sampling and the Adam optimizer are
    # host-side RL glue, not part of the forward hot path; not ported to Pallas.
    print("KERNEL_OK")
</pallas_src>

<mosaic_0001>
module attributes {stable_mosaic.version = 11 : i64} {
  func.func @_policy_kernel(%arg0: i32, %arg1: memref<8x8xf32, #tpu.memory_space<vmem>>, %arg2: memref<8x128xf32, #tpu.memory_space<vmem>>, %arg3: memref<1x128xf32, #tpu.memory_space<vmem>>, %arg4: memref<128x128xf32, #tpu.memory_space<vmem>>, %arg5: memref<1x128xf32, #tpu.memory_space<vmem>>, %arg6: memref<8x2xf32, #tpu.memory_space<vmem>>) attributes {dimension_semantics = [#tpu.dimension_semantics<parallel>], iteration_bounds = array<i64: 1>, scalar_prefetch = 0 : i64, scratch_operands = 0 : i64, tpu.core_type = #tpu.core_type<tc>, window_params = [{transform_indices = @transform_0, window_bounds = array<i64: 8, 8>}, {pipeline_mode = #tpu.pipeline_mode<synchronous>, transform_indices = @transform_1, window_bounds = array<i64: 8, 128>}, {pipeline_mode = #tpu.pipeline_mode<synchronous>, transform_indices = @transform_2, window_bounds = array<i64: 1, 128>}, {pipeline_mode = #tpu.pipeline_mode<synchronous>, transform_indices = @transform_3, window_bounds = array<i64: 128, 128>}, {pipeline_mode = #tpu.pipeline_mode<synchronous>, transform_indices = @transform_4, window_bounds = array<i64: 1, 128>}, {transform_indices = @transform_5, window_bounds = array<i64: 8, 2>}]} {
    %c0 = arith.constant 0 : index
    %c0_0 = arith.constant 0 : index
    %0 = vector.load %arg1[%c0, %c0_0] : memref<8x8xf32, #tpu.memory_space<vmem>>, vector<8x8xf32>
    %c0_1 = arith.constant 0 : index
    %c0_2 = arith.constant 0 : index
    %1 = vector.load %arg2[%c0_1, %c0_2] : memref<8x128xf32, #tpu.memory_space<vmem>>, vector<8x128xf32>
    %cst = arith.constant dense<0.000000e+00> : vector<8x128xf32>
    %2 = tpu.matmul %0, %1, %cst {dimension_numbers = #tpu.dot_dimension_numbers<[1], [0], [0], [1], [0, 0, 1, 1], [], []>} : vector<8x8xf32>, vector<8x128xf32>, vector<8x128xf32> -> vector<8x128xf32>
    %c0_3 = arith.constant 0 : index
    %c0_4 = arith.constant 0 : index
    %3 = vector.load %arg3[%c0_3, %c0_4] : memref<1x128xf32, #tpu.memory_space<vmem>>, vector<1x128xf32>
    %4 = vector.broadcast %3 : vector<1x128xf32> to vector<8x128xf32>
    %5 = arith.addf %2, %4 : vector<8x128xf32>
    %cst_5 = arith.constant 0.000000e+00 : f32
    %6 = vector.broadcast %cst_5 : f32 to vector<8x128xf32>
    %7 = arith.maximumf %5, %6 : vector<8x128xf32>
    %c0_6 = arith.constant 0 : index
    %c0_7 = arith.constant 0 : index
    %8 = vector.load %arg4[%c0_6, %c0_7] : memref<128x128xf32, #tpu.memory_space<vmem>>, vector<128x128xf32>
    %cst_8 = arith.constant dense<0.000000e+00> : vector<8x128xf32>
    %9 = tpu.matmul %7, %8, %cst_8 {dimension_numbers = #tpu.dot_dimension_numbers<[1], [0], [0], [1], [0, 0, 1, 1], [], []>} : vector<8x128xf32>, vector<128x128xf32>, vector<8x128xf32> -> vector<8x128xf32>
    %c0_9 = arith.constant 0 : index
    %c0_10 = arith.constant 0 : index
    %10 = vector.load %arg5[%c0_9, %c0_10] : memref<1x128xf32, #tpu.memory_space<vmem>>, vector<1x128xf32>
    %11 = vector.broadcast %10 : vector<1x128xf32> to vector<8x128xf32>
    %12 = arith.addf %9, %11 : vector<8x128xf32>
    %cst_11 = arith.constant 0.000000e+00 : f32
    %13 = vector.broadcast %cst_11 : f32 to vector<8x128xf32>
    %14 = arith.maximumf %12, %13 : vector<8x128xf32>
    %cst_12 = arith.constant 1.000000e-07 : f32
    %15 = vector.broadcast %cst_12 : f32 to vector<8x128xf32>
    %16 = arith.addf %14, %15 : vector<8x128xf32>
    %17 = vector.extract_strided_slice %16 {offsets = [0, 0], sizes = [8, 2], strides = [1, 1]} : vector<8x128xf32> to vector<8x2xf32>
    %c0_13 = arith.constant 0 : index
    %c0_14 = arith.constant 0 : index
    %18 = vector.load %arg6[%c0_13, %c0_14] : memref<8x2xf32, #tpu.memory_space<vmem>>, vector<8x2xf32>
    tpu.vector_store %arg6[%c0_13, %c0_14], %17 {strides = array<i32>} : memref<8x2xf32, #tpu.memory_space<vmem>>, vector<8x2xf32>,
    return
  }
  func.func @transform_0(%arg0: i32) -> (i32, i32) {
    %c0_i32 = arith.constant 0 : i32
    %c0_i32_0 = arith.constant 0 : i32
    return %arg0, %c0_i32 : i32, i32
  }
  func.func @transform_1(%arg0: i32) -> (i32, i32) {
    %c0_i32 = arith.constant 0 : i32
    %c0_i32_0 = arith.constant 0 : i32
    %c0_i32_1 = arith.constant 0 : i32
    return %c0_i32, %c0_i32_0 : i32, i32
  }
  func.func @transform_2(%arg0: i32) -> (i32, i32) {
    %c0_i32 = arith.constant 0 : i32
    %c0_i32_0 = arith.constant 0 : i32
    %c0_i32_1 = arith.constant 0 : i32
    return %c0_i32, %c0_i32_0 : i32, i32
  }
  func.func @transform_3(%arg0: i32) -> (i32, i32) {
    %c0_i32 = arith.constant 0 : i32
    %c0_i32_0 = arith.constant 0 : i32
    %c0_i32_1 = arith.constant 0 : i32
    return %c0_i32, %c0_i32_0 : i32, i32
  }
  func.func @transform_4(%arg0: i32) -> (i32, i32) {
    %c0_i32 = arith.constant 0 : i32
    %c0_i32_0 = arith.constant 0 : i32
    %c0_i32_1 = arith.constant 0 : i32
    return %c0_i32, %c0_i32_0 : i32, i32
  }
  func.func @transform_5(%arg0: i32) -> (i32, i32) {
    %c0_i32 = arith.constant 0 : i32
    %c0_i32_0 = arith.constant 0 : i32
    return %arg0, %c0_i32 : i32, i32
  }
}

</mosaic_0001>

<llo_original>
// kernel: policy_forward.1
$region0: #{policy_forward.1}
  #allocation0 [shape = 'u32[]', space=smem, size = 0x4, offset = 0x4, fixed_abs, tag = 'smem constant byte address 0x4 - core index']
  #allocation1 [shape = 'u32[144,128]{1,0:T(1,128)}', space=vmem, size = 0x12000, scoped, tag = 'internal scratch']
  %s0 = inlined_call_operand.vmem [shape: f32[8,8], index: 0, kind: input, shape index: {}]
  %s1 = inlined_call_operand.vmem [shape: f32[8,128], index: 1, kind: input, shape index: {}]
  %s2 = inlined_call_operand.vmem [shape: f32[1,128], index: 2, kind: input, shape index: {}]
  %s3 = inlined_call_operand.hbm [shape: f32[128,128], index: 3, kind: input, shape index: {}]
  %s4 = inlined_call_operand.vmem [shape: f32[1,128], index: 4, kind: input, shape index: {}]
  %s5 = inlined_call_operand.vmem [shape: f32[8,2], index: 5, kind: output, shape index: {}]
  %s6 = sld [smem:[#allocation0]]
  $region34: #{policy_forward.1} parent=0
    _
  %s8 = ssub.s32 1, %s6
  %s9 = scalar_select 0, %s8, %s6
  $region1: #{policy_forward.1} parent=0
    #allocation2 [shape = 'u8[65536]{0}', space=vmem, size = 0x10000, scoped, tag = 'input window, operand 3, single buffered']
    #allocation3 [shape = 's32[1]{0}', space=sflag, size = 0x4, scoped, tag = 'scoped memory for policy_forward.1']
    %10 = vsyncpa [#allocation3], 0
    // Predicated region
    $region2: #{policy_forward.1} parent=1 // pred_check
      _
    $region3: #{policy_forward.1} parent=1 // pred_check_branch
      %12 = sbr.rel (0) target = $region5
    $region4: #{policy_forward.1} parent=1 // pred_region
      _
    $region5: #{policy_forward.1} parent=1 // pred_fallthru
      _
    // Predicated region
    $region6: #{policy_forward.1} parent=1 // pred_check
      _
    $region7: #{policy_forward.1} parent=1 // pred_check_branch
      %14 = sbr.rel (0) target = $region9
    $region8: #{policy_forward.1} parent=1 // pred_region
      _
    $region9: #{policy_forward.1} parent=1 // pred_fallthru
      _
    // Predicated region
    $region10: #{policy_forward.1} parent=1 // pred_check
      _
    $region11: #{policy_forward.1} parent=1 // pred_check_branch
      %16 = sbr.rel (0) target = $region13
    $region12: #{policy_forward.1} parent=1 // pred_region
      _
    $region13: #{policy_forward.1} parent=1 // pred_fallthru
      _
    // Predicated region
    $region14: #{policy_forward.1} parent=1 // pred_check
      _
    $region15: #{policy_forward.1} parent=1 // pred_check_branch
      %18 = sbr.rel (0) target = $region17
    $region16: #{policy_forward.1} parent=1 // pred_region
      %s20 = ssub.s32 2048, 2048
      %21 = vsyncadd [#allocation3], %s20
      %s22 = sshll.u32 [#allocation2], 4
      %s23 = int_to_ptr.vmem [resolvable:$true] %s22
      %28 = dma.hbm_to_vmem [thread:$0]  %s3, 2048, %s23, [#allocation3], 128, 128, 8
    $region17: #{policy_forward.1} parent=1 // pred_fallthru
      _
    // Predicated region
    $region18: #{policy_forward.1} parent=1 // pred_check
      _
    $region19: #{policy_forward.1} parent=1 // pred_check_branch
      %30 = sbr.rel (0) target = $region21
    $region20: #{policy_forward.1} parent=1 // pred_region
      _
    $region21: #{policy_forward.1} parent=1 // pred_fallthru
      _
    // Predicated region
    $region22: #{policy_forward.1} parent=1 // pred_check
      _
    $region23: #{policy_forward.1} parent=1 // pred_check_branch
      %32 = sbr.rel (0) target = $region25
    $region24: #{policy_forward.1} parent=1 // pred_region
      %33 = dma.done [#allocation3], 2048
    $region25: #{policy_forward.1} parent=1 // pred_fallthru
      _
    %v34 = vld [vmem:[%s0] sm:$0xff]
    %v35 = vld [vmem:[%s1] sm:$0xff]
    %v36 = vld [vmem:[%s2] sm:$0x1]
    %v38 = vlaneseq
    %v39 = vshrl.u32 %v38, 7
    %v40 = vsub.s32 0, %v39
    %v41 = vrot.slane %v36, %v40
    %vm43 = vcmask 64512
    %v45 = vsel %vm43, %v34, 0
    %47 = vmatprep.subr.mxu0 0.0
    %48 = vmatpush1.msra.mxu0 %v35
    %49 = vmatprep.subr.mxu0 0.0
    %50 = vmatpush1.msra.mxu0 0.0
    %51 = vmatprep.subr.mxu0 0.0
    %52 = vmatpush1.msra.mxu0 0.0
    %53 = vmatprep.subr.mxu0 0.0
    %54 = vmatpush1.msra.mxu0 0.0
    %55 = vmatprep.subr.mxu0 0.0
    %56 = vmatpush1.msra.mxu0 0.0
    %57 = vmatprep.subr.mxu0 0.0
    %58 = vmatpush1.msra.mxu0 0.0
    %59 = vmatprep.subr.mxu0 0.0
    %60 = vmatpush1.msra.mxu0 0.0
    %61 = vmatprep.subr.mxu0 0.0
    %62 = vmatpush1.msra.mxu0 0.0
    %63 = vmatprep.subr.mxu0 0.0
    %64 = vmatpush1.msra.mxu0 0.0
    %65 = vmatprep.subr.mxu0 0.0
    %66 = vmatpush1.msra.mxu0 0.0
    %67 = vmatprep.subr.mxu0 0.0
    %68 = vmatpush1.msra.mxu0 0.0
    %69 = vmatprep.subr.mxu0 0.0
    %70 = vmatpush1.msra.mxu0 0.0
    %71 = vmatprep.subr.mxu0 0.0
    %72 = vmatpush1.msra.mxu0 0.0
    %73 = vmatprep.subr.mxu0 0.0
    %74 = vmatpush1.msra.mxu0 0.0
    %75 = vmatprep.subr.mxu0 0.0
    %76 = vmatpush1.msra.mxu0 0.0
    %77 = vmatprep.subr.mxu0 0.0
    %78 = vmatpush1.msra.mxu0 0.0
    %79 = vmatprep.subr.mxu0 0.0
    %80 = vmatpush1.msra.mxu0 0.0
    %81 = vmatprep.subr.mxu0 0.0
    %82 = vmatpush1.msra.mxu0 0.0
    %83 = vmatprep.subr.mxu0 0.0
    %84 = vmatpush1.msra.mxu0 0.0
    %85 = vmatprep.subr.mxu0 0.0
    %86 = vmatpush1.msra.mxu0 0.0
    %87 = vmatprep.subr.mxu0 0.0
    %88 = vmatpush1.msra.mxu0 0.0
    %89 = vmatprep.subr.mxu0 0.0
    %90 = vmatpush1.msra.mxu0 0.0
    %91 = vmatprep.subr.mxu0 0.0
    %92 = vmatpush1.msra.mxu0 0.0
    %93 = vmatprep.subr.mxu0 0.0
    %94 = vmatpush1.msra.mxu0 0.0
    %95 = vmatprep.subr.mxu0 0.0
    %96 = vmatpush1.msra.mxu0 0.0
    %97 = vmatprep.subr.mxu0 0.0
    %98 = vmatpush1.msra.mxu0 0.0
    %99 = vmatprep.subr.mxu0 0.0
    %100 = vmatpush1.msra.mxu0 0.0
    %101 = vmatprep.subr.mxu0 0.0
    %102 = vmatpush1.msra.mxu0 0.0
    %103 = vmatprep.subr.mxu0 0.0
    %104 = vmatpush1.msra.mxu0 0.0
    %105 = vmatprep.subr.mxu0 0.0
    %106 = vmatpush1.msra.mxu0 0.0
    %107 = vmatprep.subr.mxu0 0.0
    %108 = vmatpush1.msra.mxu0 0.0
    %109 = vmatprep.subr.mxu0 0.0
    %110 = vmatpush1.msra.mxu0 0.0
    %111 = vmatprep.mubr.f32.mxu0 0.0
    %112 = vmatmul.mubr.f32.gmra.mrb[0].mxu0 %v45
    %v113 = vpop.f32.mrb[0].mxu0
    %v114 = vadd.f32 %v41, %v113
    %v115 = vpop.f32.mrb[0].mxu0
    %116 = vdwg.mxu0
    %v117 = vmax.f32 %v114, 0.0
    %v118 = vld [vmem:[#allocation2] sm:$0xff]
    %v119 = vld [vmem:[#allocation2 + $0x8] sm:$0xff]
    %v120 = vld [vmem:[#allocation2 + $0x10] sm:$0xff]
    %v121 = vld [vmem:[#allocation2 + $0x18] sm:$0xff]
    %v122 = vld [vmem:[#allocation2 + $0x20] sm:$0xff]
    %v123 = vld [vmem:[#allocation2 + $0x28] sm:$0xff]
    %v124 = vld [vmem:[#allocation2 + $0x30] sm:$0xff]
    %v125 = vld [vmem:[#allocation2 + $0x38] sm:$0xff]
    %v126 = vld [vmem:[#allocation2 + $0x40] sm:$0xff]
    %v127 = vld [vmem:[#allocation2 + $0x48] sm:$0xff]
    %v128 = vld [vmem:[#allocation2 + $0x50] sm:$0xff]
    %v129 = vld [vmem:[#allocation2 + $0x58] sm:$0xff]
    %v130 = vld [vmem:[#allocation2 + $0x60] sm:$0xff]
    %v131 = vld [vmem:[#allocation2 + $0x68] sm:$0xff]
    %v132 = vld [vmem:[#allocation2 + $0x70] sm:$0xff]
    %v133 = vld [vmem:[#allocation2 + $0x78] sm:$0xff]
    %v134 = vld [vmem:[%s4] sm:$0x1]
    %v136 = vlaneseq
    %v137 = vshrl.u32 %v136, 7
    %v138 = vsub.s32 0, %v137
    %v139 = vrot.slane %v134, %v138
    %141 = vmatprep.subr.mxu0 0.0
    %142 = vmatpush1.msra.mxu0 %v118
    %143 = vmatprep.subr.mxu0 0.0
    %144 = vmatpush1.msra.mxu0 %v119
    %145 = vmatprep.subr.mxu0 0.0
    %146 = vmatpush1.msra.mxu0 %v120
    %147 = vmatprep.subr.mxu0 0.0
    %148 = vmatpush1.msra.mxu0 %v121
    %149 = vmatprep.subr.mxu0 0.0
    %150 = vmatpush1.msra.mxu0 %v122
    %151 = vmatprep.subr.mxu0 0.0
    %152 = vmatpush1.msra.mxu0 %v123
    %153 = vmatprep.subr.mxu0 0.0
    %154 = vmatpush1.msra.mxu0 %v124
    %155 = vmatprep.subr.mxu0 0.0
    %156 = vmatpush1.msra.mxu0 %v125
    %157 = vmatprep.subr.mxu0 0.0
    %158 = vmatpush1.msra.mxu0 %v126
    %159 = vmatprep.subr.mxu0 0.0
    %160 = vmatpush1.msra.mxu0 %v127
    %161 = vmatprep.subr.mxu0 0.0
    %162 = vmatpush1.msra.mxu0 %v128
    %163 = vmatprep.subr.mxu0 0.0
    %164 = vmatpush1.msra.mxu0 %v129
    %165 = vmatprep.subr.mxu0 0.0
    %166 = vmatpush1.msra.mxu0 %v130
    %167 = vmatprep.subr.mxu0 0.0
    %168 = vmatpush1.msra.mxu0 %v131
    %169 = vmatprep.subr.mxu0 0.0
    %170 = vmatpush1.msra.mxu0 %v132
    %171 = vmatprep.subr.mxu0 0.0
    %172 = vmatpush1.msra.mxu0 %v133
    %173 = vmatprep.subr.mxu0 0.0
    %174 = vmatpush1.msra.mxu0 0.0
    %175 = vmatprep.subr.mxu0 0.0
    %176 = vmatpush1.msra.mxu0 0.0
    %177 = vmatprep.subr.mxu0 0.0
    %178 = vmatpush1.msra.mxu0 0.0
    %179 = vmatprep.subr.mxu0 0.0
    %180 = vmatpush1.msra.mxu0 0.0
    %181 = vmatprep.subr.mxu0 0.0
    %182 = vmatpush1.msra.mxu0 0.0
    %183 = vmatprep.subr.mxu0 0.0
    %184 = vmatpush1.msra.mxu0 0.0
    %185 = vmatprep.subr.mxu0 0.0
    %186 = vmatpush1.msra.mxu0 0.0
    %187 = vmatprep.subr.mxu0 0.0
    %188 = vmatpush1.msra.mxu0 0.0
    %189 = vmatprep.subr.mxu0 0.0
    %190 = vmatpush1.msra.mxu0 0.0
    %191 = vmatprep.subr.mxu0 0.0
    %192 = vmatpush1.msra.mxu0 0.0
    %193 = vmatprep.subr.mxu0 0.0
    %194 = vmatpush1.msra.mxu0 0.0
    %195 = vmatprep.subr.mxu0 0.0
    %196 = vmatpush1.msra.mxu0 0.0
    %197 = vmatprep.subr.mxu0 0.0
    %198 = vmatpush1.msra.mxu0 0.0
    %199 = vmatprep.subr.mxu0 0.0
    %200 = vmatpush1.msra.mxu0 0.0
    %201 = vmatprep.subr.mxu0 0.0
    %202 = vmatpush1.msra.mxu0 0.0
    %203 = vmatprep.subr.mxu0 0.0
    %204 = vmatpush1.msra.mxu0 0.0
    %205 = vmatprep.mubr.f32.mxu0 0.0
    %206 = vmatmul.mubr.f32.gmra.mrb[0].mxu0 %v117
    %v207 = vpop.f32.mrb[0].mxu0
    %v208 = vadd.f32 %v139, %v207
    %v209 = vpop.f32.mrb[0].mxu0
    %210 = vdwg.mxu0
    %v211 = vmax.f32 %v208, 0.0
    %v212 = vadd.f32 %v211, 1e-07
    %vm213 = vcmask 15360
    %214 = vst.msk [vmem:[%s5] sm:$0xff] %vm213, %v212
    // Predicated region
    $region26: #{policy_forward.1} parent=1 // pred_check
      _
    $region27: #{policy_forward.1} parent=1 // pred_check_branch
      %216 = sbr.rel (0) target = $region29
    $region28: #{policy_forward.1} parent=1 // pred_region
      _
    $region29: #{policy_forward.1} parent=1 // pred_fallthru
      _
    // Predicated region
    $region30: #{policy_forward.1} parent=1 // pred_check
      _
    $region31: #{policy_forward.1} parent=1 // pred_check_branch
      %218 = sbr.rel (0) target = $region33
    $region32: #{policy_forward.1} parent=1 // pred_region
      _
    $region33: #{policy_forward.1} parent=1 // pred_fallthru
      _
    %219 = vsyncpa [#allocation3], 1

</llo_original>
